<compile_context>
chip_gen: v7x
topology: tpu7x:2x2x1
jax: 0.10.0
libtpu: 0.0.40
codegen_flags: <defaults>
</compile_context>

<pallas_src>
import jax
import jax.numpy as jnp
from jax.experimental import pallas as pl
from jax.experimental.pallas import tpu as pltpu

_LANE = 128
_PALLAS_MIN_ELEMS = 1 << 16        # below this, XLA fusion beats kernel launch
_TARGET_BLOCK_BYTES = 8 * 1024 * 1024


def _decision_kernel(dec_ref, x_ref, o_ref):
    # dec_ref: (1,) scalar parameter in SMEM (f32)
    # x_ref / o_ref: (block_rows, width) tile in VMEM
    d = dec_ref[0]
    xv = x_ref[...].astype(jnp.float32)
    o_ref[...] = jax.nn.sigmoid(d - xv).astype(o_ref.dtype)


def _reference_path(x, decision):
    # Same math as the kernel (f32 compute, cast back) for path consistency.
    d = decision.astype(jnp.float32)[0]
    return jax.nn.sigmoid(d - x.astype(jnp.float32)).astype(x.dtype)


def _round_down(v, m):
    return (v // m) * m


def _sublane_multiple(dtype):
    itemsize = jnp.dtype(dtype).itemsize
    if itemsize >= 4:
        return 8
    if itemsize == 2:
        return 16
    return 32


def _pick_width(n):
    """Largest lane-aligned width that divides n exactly (free reshape)."""
    if n % _LANE != 0:
        return None
    for w in (4096, 2048, 1024, 512, 256, 128):
        if n % w == 0:
            return w
    return None  # unreachable: 128 always divides when n % 128 == 0


def differentiable_decision_node(x, decision, *, force_pallas=False):
    """x: arbitrary-shape float array (e.g. NCHW). decision: (1,) float.
    Returns sigmoid(decision - x) with the same shape/dtype as x."""
    orig_shape = x.shape
    n = x.size

    width = _pick_width(n)

    # Fallback: tiny tensors (launch overhead dominates) or ragged sizes that
    # are not lane-divisible (padding would cost extra HBM round trips while
    # XLA fusion is already at the roofline for this op).
    if width is None or (not force_pallas and n < _PALLAS_MIN_ELEMS):
        return _reference_path(x, decision)

    rows = n // width
    x2d = x.reshape(rows, width)  # contiguous reshape: free, no copy

    sub = _sublane_multiple(x.dtype)
    itemsize = jnp.dtype(x.dtype).itemsize

    # Block rows: ~8 MiB blocks, rounded to the dtype's packed sublane count.
    block_rows = max(sub, _round_down(_TARGET_BLOCK_BYTES // (width * itemsize), sub))

    # Megacore guard (v7x: 2 TCs): keep at least 2 grid steps when possible.
    if rows >= 2 * sub:
        half = max(sub, _round_down(pl.cdiv(rows, 2), sub))
        block_rows = min(block_rows, half)

    if block_rows >= rows:
        block_rows = rows  # full-extent block is always legal

    grid = (pl.cdiv(rows, block_rows),)

    dec_f32 = decision.astype(jnp.float32)

    out2d = pl.pallas_call(
        _decision_kernel,
        out_shape=jax.ShapeDtypeStruct((rows, width), x.dtype),
        grid=grid,
        in_specs=[
            pl.BlockSpec(memory_space=pltpu.SMEM),                # scalar decision
            pl.BlockSpec((block_rows, width), lambda i: (i, 0)),  # x row-block
        ],
        out_specs=pl.BlockSpec((block_rows, width), lambda i: (i, 0)),
        compiler_params=pltpu.CompilerParams(
            dimension_semantics=("parallel",),     # megacore sharding on v7x
            vmem_limit_bytes=48 * 1024 * 1024,     # ~32 MiB buffered + headroom
        ),
    )(dec_f32, x2d)

    return out2d.reshape(orig_shape)


if __name__ == "__main__":
    key = jax.random.PRNGKey(0)
    k_x, k_d, k_b, k_y = jax.random.split(key, 4)

    # Deterministic "parameter" init (torch.randn(1) analogue)
    decision = jax.random.normal(k_d, (1,), dtype=jnp.float32)

    # 1) Small NCHW input, lane-divisible size -> force the Pallas path.
    x = jax.random.normal(k_x, (2, 4, 16, 16), dtype=jnp.float32)
    out = differentiable_decision_node(x, decision, force_pallas=True)
    out = jax.block_until_ready(out)
    ref = _reference_path(x, decision)
    assert out.shape == x.shape
    assert out.dtype == x.dtype
    assert jnp.allclose(out, ref, atol=1e-6, rtol=1e-6)

    # 2) bf16 input, multi-step grid (exercises packed-dtype block rounding).
    xb = jax.random.normal(k_b, (4, 8, 64, 64), dtype=jnp.bfloat16)
    out_b = differentiable_decision_node(xb, decision, force_pallas=True)
    out_b = jax.block_until_ready(out_b)
    ref_b = _reference_path(xb, decision)
    assert out_b.shape == xb.shape
    assert out_b.dtype == xb.dtype
    assert jnp.allclose(out_b.astype(jnp.float32), ref_b.astype(jnp.float32),
                        atol=1e-2, rtol=1e-2)

    # 3) Ragged (non-lane-divisible) shape -> XLA fallback path (by design).
    y = jax.random.normal(k_y, (3, 5, 7, 11), dtype=jnp.float32)
    out_y = differentiable_decision_node(y, decision)
    out_y = jax.block_until_ready(out_y)
    ref_y = jax.nn.sigmoid(decision[0] - y)
    assert out_y.shape == y.shape
    assert jnp.allclose(out_y, ref_y, atol=1e-6, rtol=1e-6)

    print("KERNEL_OK")
</pallas_src>

<mosaic_0001>
module attributes {stable_mosaic.version = 11 : i64} {
  func.func @_decision_kernel(%arg0: i32, %arg1: memref<1xf32, #tpu.memory_space<smem>>, %arg2: memref<1x2048xf32, #tpu.memory_space<vmem>>, %arg3: memref<1x2048xf32, #tpu.memory_space<vmem>>) attributes {dimension_semantics = [#tpu.dimension_semantics<parallel>], iteration_bounds = array<i64: 1>, scalar_prefetch = 0 : i64, scratch_operands = 0 : i64, tpu.core_type = #tpu.core_type<tc>, window_params = [{transform_indices = @transform_0, window_bounds = array<i64: 1>}, {transform_indices = @transform_1, window_bounds = array<i64: 1, 2048>}, {transform_indices = @transform_2, window_bounds = array<i64: 1, 2048>}]} {
    %c0 = arith.constant 0 : index
    %0 = memref.load %arg1[%c0] : memref<1xf32, #tpu.memory_space<smem>>
    %c0_0 = arith.constant 0 : index
    %c0_1 = arith.constant 0 : index
    %1 = vector.load %arg2[%c0_0, %c0_1] : memref<1x2048xf32, #tpu.memory_space<vmem>>, vector<1x2048xf32>
    %2 = vector.broadcast %0 : f32 to vector<1x2048xf32>
    %3 = arith.subf %2, %1 : vector<1x2048xf32>
    %4 = arith.negf %3 : vector<1x2048xf32>
    %5 = math.exp %4 : vector<1x2048xf32>
    %cst = arith.constant 1.000000e+00 : f32
    %6 = vector.broadcast %cst : f32 to vector<1x2048xf32>
    %7 = arith.addf %6, %5 : vector<1x2048xf32>
    %8 = arith.divf %6, %7 : vector<1x2048xf32>
    %c0_2 = arith.constant 0 : index
    %c0_3 = arith.constant 0 : index
    %9 = vector.load %arg3[%c0_2, %c0_3] : memref<1x2048xf32, #tpu.memory_space<vmem>>, vector<1x2048xf32>
    tpu.vector_store %arg3[%c0_2, %c0_3], %8 {strides = array<i32>} : memref<1x2048xf32, #tpu.memory_space<vmem>>, vector<1x2048xf32>,
    return
  }
  func.func @transform_0(%arg0: i32) -> i32 {
    %c0_i32 = arith.constant 0 : i32
    %c0_i32_0 = arith.constant 0 : i32
    return %c0_i32 : i32
  }
  func.func @transform_1(%arg0: i32) -> (i32, i32) {
    %c0_i32 = arith.constant 0 : i32
    %c0_i32_0 = arith.constant 0 : i32
    return %arg0, %c0_i32 : i32, i32
  }
  func.func @transform_2(%arg0: i32) -> (i32, i32) {
    %c0_i32 = arith.constant 0 : i32
    %c0_i32_0 = arith.constant 0 : i32
    return %arg0, %c0_i32 : i32, i32
  }
}

</mosaic_0001>

<llo_original>
// kernel: tpu_custom_call.1
$region0: #{tpu_custom_call.1}
  #allocation0 [shape = 'u32[]', space=smem, size = 0x4, offset = 0x4, fixed_abs, tag = 'smem constant byte address 0x4 - core index']
  #allocation1 [shape = 'u32[144,128]{1,0:T(1,128)}', space=vmem, size = 0x12000, scoped, tag = 'internal scratch']
  #allocation2 [shape = 'f32[1]{0:T(128)S(6)}', space=smem, size = 0x200, scoped, tag = 'scoped memory for tpu_custom_call.1']
  %s0 = inlined_call_operand.<no memory space> [shape: f32[1], index: 0, kind: input, shape index: {}]
  %s1 = inlined_call_operand.hbm [shape: f32[1,2048], index: 1, kind: input, shape index: {}]
  %s2 = inlined_call_operand.hbm [shape: f32[1,2048], index: 2, kind: output, shape index: {}]
  %s3 = sld [smem:[#allocation0]]
  $region22: #{tpu_custom_call.1} parent=0
    _
  %s5 = ssub.s32 1, %s3
  %s6 = scalar_select 0, %s5, %s3
  %7 = sst [smem:[#allocation2]] %s0
  $region1: #{tpu_custom_call.1} parent=0
    #allocation3 [shape = 'u8[8192]{0}', space=vmem, size = 0x2000, scoped, tag = 'input window, operand 1, single buffered']
    #allocation4 [shape = 's32[1]{0}', space=sflag, size = 0x4, scoped, tag = 'scoped memory for tpu_custom_call.1']
    #allocation5 [shape = 's32[1]{0}', space=sflag, size = 0x4, scoped, tag = 'scoped memory for tpu_custom_call.1']
    #allocation6 [shape = 'u8[8192]{0}', space=vmem, size = 0x2000, scoped, tag = 'output window, operand 0, single buffered']
    %8 = vsyncpa [#allocation4], 0
    %9 = vsyncpa [#allocation5], 0
    // Predicated region
    $region2: #{tpu_custom_call.1} parent=1 // pred_check
      _
    $region3: #{tpu_custom_call.1} parent=1 // pred_check_branch
      %11 = sbr.rel (0) target = $region5
    $region4: #{tpu_custom_call.1} parent=1 // pred_region
      _
    $region5: #{tpu_custom_call.1} parent=1 // pred_fallthru
      _
    // Predicated region
    $region6: #{tpu_custom_call.1} parent=1 // pred_check
      _
    $region7: #{tpu_custom_call.1} parent=1 // pred_check_branch
      %13 = sbr.rel (0) target = $region9
    $region8: #{tpu_custom_call.1} parent=1 // pred_region
      %s15 = ssub.s32 256, 256
      %16 = vsyncadd [#allocation4], %s15
      %s18 = sshll.u32 [#allocation3], 4
      %s19 = int_to_ptr.vmem [resolvable:$true] %s18
      %21 = dma.hbm_to_vmem [thread:$0]  %s1, 256, %s19, [#allocation4]
    $region9: #{tpu_custom_call.1} parent=1 // pred_fallthru
      _
    // Predicated region
    $region10: #{tpu_custom_call.1} parent=1 // pred_check
      _
    $region11: #{tpu_custom_call.1} parent=1 // pred_check_branch
      %23 = sbr.rel (0) target = $region13
    $region12: #{tpu_custom_call.1} parent=1 // pred_region
      %24 = dma.done [#allocation4], 256
    $region13: #{tpu_custom_call.1} parent=1 // pred_fallthru
      _
    %s25 = sld [smem:[#allocation2]]
    %v26 = vld [vmem:[#allocation3] sm:$0xff]
    %v27 = vld [vmem:[#allocation3 + $0x8] sm:$0xff]
    %v28 = vstv %s25
    %v29 = vsub.f32 %v28, %v26
    %v30 = vsub.f32 %v28, %v27
    %v31 = vxor.u32 %v29, 2147483648
    %v32 = vxor.u32 %v30, 2147483648
    %v33 = vmul.f32 %v31, 1.442695
    %v34 = vpow.pop %v33
    %v35 = vmul.f32 %v32, 1.442695
    %v36 = vpow.pop %v35
    %v37 = vadd.f32 %v34, 1.0
    %v38 = vadd.f32 %v36, 1.0
    %v39 = vrcp.pop %v37
    %v40 = vmul.f32 1.0, %v39
    %v41 = vrcp.pop %v38
    %v42 = vmul.f32 1.0, %v41
    %43 = vst [vmem:[#allocation6] sm:$0xff] %v40
    %44 = vst [vmem:[#allocation6 + $0x8] sm:$0xff] %v42
    // Predicated region
    $region14: #{tpu_custom_call.1} parent=1 // pred_check
      _
    $region15: #{tpu_custom_call.1} parent=1 // pred_check_branch
      %46 = sbr.rel (0) target = $region17
    $region16: #{tpu_custom_call.1} parent=1 // pred_region
      %s48 = ssub.s32 256, 256
      %49 = vsyncadd [#allocation5], %s48
      %s51 = sshll.u32 [#allocation6], 4
      %s52 = int_to_ptr.vmem [resolvable:$true] %s51
      %54 = dma.vmem_to_hbm [thread:$0]  %s52, 256, %s2, [#allocation5]
    $region17: #{tpu_custom_call.1} parent=1 // pred_fallthru
      _
    // Predicated region
    $region18: #{tpu_custom_call.1} parent=1 // pred_check
      _
    $region19: #{tpu_custom_call.1} parent=1 // pred_check_branch
      %56 = sbr.rel (0) target = $region21
    $region20: #{tpu_custom_call.1} parent=1 // pred_region
      %57 = dma.done [#allocation5], 256
    $region21: #{tpu_custom_call.1} parent=1 // pred_fallthru
      _
    %58 = vsyncpa [#allocation4], 1
    %59 = vsyncpa [#allocation5], 1

</llo_original>
